<compile_context>
chip_gen: v5e
topology: v5e:2x2
jax: 0.10.0
libtpu: 0.0.40
codegen_flags: <defaults>
</compile_context>

<pallas_src>
import jax
import jax.numpy as jnp
from jax.experimental import pallas as pl
from jax.experimental.pallas import tpu as pltpu


def cross_entropy_loss(logits, targets, ignore_index=-100):
    """Matches torch.nn.CrossEntropyLoss()(logits, targets), mean reduction."""
    assert logits.ndim == 2, "expected (N, C) logits"
    n, c = logits.shape
    assert targets.shape == (n,), "expected (N,) integer class targets"

    t2d = targets.astype(jnp.int32).reshape(n, 1)

    # --- Tile sizing: largest row tile with a <=2 MiB logits block (so 2x
    # double-buffering of both inputs fits every generation's default scoped
    # VMEM), clamped to [8, 1024] rows and rounded to a sublane multiple. -----
    bytes_per_row = c * jnp.dtype(logits.dtype).itemsize
    max_tile_bytes = 2 * 1024 * 1024
    tile_n = max(8, min(1024, max_tile_bytes // max(bytes_per_row, 1)))
    tile_n = (tile_n // 8) * 8
    if tile_n >= n:
        tile_n = n  # single full block (block shape == array shape is allowed)
    num_tiles = pl.cdiv(n, tile_n)

    def kernel(x_ref, t_ref, o_ref):
        x = x_ref[...].astype(jnp.float32)       # (tile_n, C) logits
        t = t_ref[...]                           # (tile_n, 1) int32 targets

        # Per-row validity: inside the real N rows (ragged last tile) and not
        # the PyTorch ignore_index.
        i = pl.program_id(0)
        row = jax.lax.broadcasted_iota(jnp.int32, (tile_n, 1), 0)
        global_row = i * tile_n + row
        valid = (global_row < n) & (t != ignore_index)

        # Numerically stable log-sum-exp over the class axis.
        m = jnp.max(x, axis=-1, keepdims=True)                              # (tile_n, 1)
        lse = m + jnp.log(jnp.sum(jnp.exp(x - m), axis=-1, keepdims=True))  # (tile_n, 1)

        # Target-class logit via one-hot compare (no dynamic gather on TPU).
        col = jax.lax.broadcasted_iota(jnp.int32, x.shape, 1)               # (tile_n, C)
        x_tgt = jnp.sum(jnp.where(col == t, x, 0.0), axis=-1, keepdims=True)

        losses = jnp.where(valid, lse - x_tgt, 0.0)                         # (tile_n, 1)
        loss_sum = jnp.sum(losses)
        valid_cnt = jnp.sum(jnp.where(valid, 1.0, 0.0))

        # Lane-dense partial block: lane 0 = loss sum, lane 1 = valid count.
        lane = jax.lax.broadcasted_iota(jnp.int32, (1, 8, 128), 2)
        o_ref[...] = jnp.where(lane == 0, loss_sum,
                               jnp.where(lane == 1, valid_cnt, 0.0))

    out = pl.pallas_call(
        kernel,
        out_shape=jax.ShapeDtypeStruct((num_tiles, 8, 128), jnp.float32),
        grid=(num_tiles,),
        in_specs=[
            pl.BlockSpec((tile_n, c), lambda i: (i, 0)),   # logits row tile
            pl.BlockSpec((tile_n, 1), lambda i: (i, 0)),   # target row tile
        ],
        out_specs=pl.BlockSpec((1, 8, 128), lambda i: (i, 0, 0)),
        compiler_params=pltpu.CompilerParams(
            dimension_semantics=("parallel",)),
    )(logits, t2d)

    # Finish the mean outside the kernel: divide by the true valid-row count.
    loss_sum = jnp.sum(out[:, 0, 0])
    valid_cnt = jnp.sum(out[:, 0, 1])
    return loss_sum / valid_cnt


if __name__ == "__main__":
    key = jax.random.PRNGKey(0)
    k1, k2 = jax.random.split(key)
    # Small classification head: batch=8, classes=32.
    N, C = 8, 32
    logits = jax.random.normal(k1, (N, C), dtype=jnp.float32)
    targets = jax.random.randint(k2, (N,), 0, C, dtype=jnp.int32)

    loss = cross_entropy_loss(logits, targets)
    jax.block_until_ready(loss)

    # Reference: -mean(log_softmax(logits)[i, targets[i]])
    logp = jax.nn.log_softmax(logits, axis=-1)
    ref = -jnp.mean(logp[jnp.arange(N), targets])
    assert jnp.allclose(loss, ref, rtol=1e-5, atol=1e-5), (loss, ref)

    print("KERNEL_OK")
</pallas_src>

<mosaic_0001>
module attributes {stable_mosaic.version = 11 : i64} {
  func.func @kernel(%arg0: i32, %arg1: memref<8x32xf32, #tpu.memory_space<vmem>>, %arg2: memref<8x1xi32, #tpu.memory_space<vmem>>, %arg3: memref<1x8x128xf32, #tpu.memory_space<vmem>>) attributes {dimension_semantics = [#tpu.dimension_semantics<parallel>], iteration_bounds = array<i64: 1>, scalar_prefetch = 0 : i64, scratch_operands = 0 : i64, tpu.core_type = #tpu.core_type<tc>, window_params = [{transform_indices = @transform_0, window_bounds = array<i64: 8, 32>}, {transform_indices = @transform_1, window_bounds = array<i64: 8, 1>}, {transform_indices = @transform_2, window_bounds = array<i64: 1, 8, 128>}]} {
    %c0 = arith.constant 0 : index
    %c0_0 = arith.constant 0 : index
    %0 = vector.load %arg1[%c0, %c0_0] : memref<8x32xf32, #tpu.memory_space<vmem>>, vector<8x32xf32>
    %c0_1 = arith.constant 0 : index
    %c0_2 = arith.constant 0 : index
    %1 = vector.load %arg2[%c0_1, %c0_2] : memref<8x1xi32, #tpu.memory_space<vmem>>, vector<8x1xi32>
    %2 = tpu.iota {dimensions = array<i32: 0>} : vector<8x1xi32>
    %c8_i32 = arith.constant 8 : i32
    %3 = arith.muli %arg0, %c8_i32 : i32
    %4 = vector.broadcast %3 : i32 to vector<8x1xi32>
    %5 = arith.addi %4, %2 : vector<8x1xi32>
    %c8_i32_3 = arith.constant 8 : i32
    %6 = vector.broadcast %c8_i32_3 : i32 to vector<8x1xi32>
    %7 = arith.cmpi slt, %5, %6 : vector<8x1xi32>
    %c-100_i32 = arith.constant -100 : i32
    %8 = vector.broadcast %c-100_i32 : i32 to vector<8x1xi32>
    %9 = arith.cmpi ne, %1, %8 : vector<8x1xi32>
    %10 = arith.andi %7, %9 : vector<8x1xi1>
    %cst = arith.constant dense<0xFF800000> : vector<8xf32>
    %11 = vector.multi_reduction <maximumf>, %0, %cst [1] : vector<8x32xf32> to vector<8xf32>
    %12 = vector.shape_cast %11 : vector<8xf32> to vector<8x1xf32>
    %13 = vector.broadcast %12 : vector<8x1xf32> to vector<8x32xf32>
    %14 = arith.subf %0, %13 : vector<8x32xf32>
    %15 = math.exp %14 : vector<8x32xf32>
    %cst_4 = arith.constant dense<0.000000e+00> : vector<8xf32>
    %16 = vector.multi_reduction <add>, %15, %cst_4 [1] : vector<8x32xf32> to vector<8xf32>
    %17 = vector.shape_cast %16 : vector<8xf32> to vector<8x1xf32>
    %18 = math.log %17 : vector<8x1xf32>
    %19 = arith.addf %12, %18 : vector<8x1xf32>
    %20 = tpu.iota {dimensions = array<i32: 1>} : vector<8x32xi32>
    %21 = vector.broadcast %1 : vector<8x1xi32> to vector<8x32xi32>
    %22 = arith.cmpi eq, %20, %21 : vector<8x32xi32>
    %cst_5 = arith.constant 0.000000e+00 : f32
    %23 = vector.broadcast %cst_5 : f32 to vector<8x32xf32>
    %24 = arith.select %22, %0, %23 : vector<8x32xi1>, vector<8x32xf32>
    %cst_6 = arith.constant dense<0.000000e+00> : vector<8xf32>
    %25 = vector.multi_reduction <add>, %24, %cst_6 [1] : vector<8x32xf32> to vector<8xf32>
    %26 = vector.shape_cast %25 : vector<8xf32> to vector<8x1xf32>
    %27 = arith.subf %19, %26 : vector<8x1xf32>
    %cst_7 = arith.constant 0.000000e+00 : f32
    %28 = vector.broadcast %cst_7 : f32 to vector<8x1xf32>
    %29 = arith.select %10, %27, %28 : vector<8x1xi1>, vector<8x1xf32>
    %30 = vector.shape_cast %29 : vector<8x1xf32> to vector<1x8x1xf32>
    %cst_8 = arith.constant dense<0.000000e+00> : vector<1xf32>
    %31 = vector.multi_reduction <add>, %30, %cst_8 [1, 2] : vector<1x8x1xf32> to vector<1xf32>
    %32 = vector.shape_cast %31 : vector<1xf32> to vector<1x1x1xf32>
    %33 = vector.extract %32[0, 0, 0] : f32 from vector<1x1x1xf32>
    %cst_9 = arith.constant 1.000000e+00 : f32
    %cst_10 = arith.constant 0.000000e+00 : f32
    %34 = vector.broadcast %cst_9 : f32 to vector<8x1xf32>
    %35 = vector.broadcast %cst_10 : f32 to vector<8x1xf32>
    %36 = arith.select %10, %34, %35 : vector<8x1xi1>, vector<8x1xf32>
    %37 = vector.shape_cast %36 : vector<8x1xf32> to vector<1x8x1xf32>
    %cst_11 = arith.constant dense<0.000000e+00> : vector<1xf32>
    %38 = vector.multi_reduction <add>, %37, %cst_11 [1, 2] : vector<1x8x1xf32> to vector<1xf32>
    %39 = vector.shape_cast %38 : vector<1xf32> to vector<1x1x1xf32>
    %40 = vector.extract %39[0, 0, 0] : f32 from vector<1x1x1xf32>
    %41 = tpu.iota {dimensions = array<i32: 2>} : vector<1x8x128xi32>
    %c0_i32 = arith.constant 0 : i32
    %42 = vector.broadcast %c0_i32 : i32 to vector<1x8x128xi32>
    %43 = arith.cmpi eq, %41, %42 : vector<1x8x128xi32>
    %c1_i32 = arith.constant 1 : i32
    %44 = vector.broadcast %c1_i32 : i32 to vector<1x8x128xi32>
    %45 = arith.cmpi eq, %41, %44 : vector<1x8x128xi32>
    %cst_12 = arith.constant 0.000000e+00 : f32
    %46 = vector.broadcast %40 : f32 to vector<1x8x128xf32>
    %47 = vector.broadcast %cst_12 : f32 to vector<1x8x128xf32>
    %48 = arith.select %45, %46, %47 : vector<1x8x128xi1>, vector<1x8x128xf32>
    %49 = vector.broadcast %33 : f32 to vector<1x8x128xf32>
    %50 = arith.select %43, %49, %48 : vector<1x8x128xi1>, vector<1x8x128xf32>
    %c0_13 = arith.constant 0 : index
    %c0_14 = arith.constant 0 : index
    %c0_15 = arith.constant 0 : index
    %51 = vector.load %arg3[%c0_13, %c0_14, %c0_15] : memref<1x8x128xf32, #tpu.memory_space<vmem>>, vector<1x8x128xf32>
    tpu.vector_store %arg3[%c0_13, %c0_14, %c0_15], %50 {strides = array<i32>} : memref<1x8x128xf32, #tpu.memory_space<vmem>>, vector<1x8x128xf32>,
    return
  }
  func.func @transform_0(%arg0: i32) -> (i32, i32) {
    %c0_i32 = arith.constant 0 : i32
    %c0_i32_0 = arith.constant 0 : i32
    return %arg0, %c0_i32 : i32, i32
  }
  func.func @transform_1(%arg0: i32) -> (i32, i32) {
    %c0_i32 = arith.constant 0 : i32
    %c0_i32_0 = arith.constant 0 : i32
    return %arg0, %c0_i32 : i32, i32
  }
  func.func @transform_2(%arg0: i32) -> (i32, i32, i32) {
    %c0_i32 = arith.constant 0 : i32
    %c0_i32_0 = arith.constant 0 : i32
    %c0_i32_1 = arith.constant 0 : i32
    return %arg0, %c0_i32, %c0_i32_0 : i32, i32, i32
  }
}

</mosaic_0001>

<llo_original>
// kernel: tpu_custom_call.1
$region0: #{tpu_custom_call.1}
  #allocation0 [shape = 'u32[]', space=smem, size = 0x4, offset = 0x4, fixed_abs, tag = 'smem constant byte address 0x4 - core index']
  #allocation1 [shape = 'u32[72,128]{1,0:T(1,128)}', space=vmem, size = 0x9000, scoped, tag = 'internal scratch']
  %s0 = inlined_call_operand.vmem [shape: f32[8,32], index: 0, kind: input, shape index: {}]
  %s1 = inlined_call_operand.vmem [shape: s32[8,1], index: 1, kind: input, shape index: {}]
  %s2 = inlined_call_operand.hbm [shape: f32[1,8,128], index: 2, kind: output, shape index: {}]
  %s3 = sld [smem:[#allocation0]]
  $region18: #{tpu_custom_call.1} parent=0
    _
  %s5 = ssub.s32 1, %s3
  %s6 = scalar_select 0, %s5, %s3
  $region1: #{tpu_custom_call.1} parent=0
    #allocation2 [shape = 'u8[4096]{0}', space=vmem, size = 0x1000, scoped, tag = 'output window, operand 0, single buffered']
    #allocation3 [shape = 's32[1]{0}', space=sflag, size = 0x4, scoped, tag = 'scoped memory for tpu_custom_call.1']
    %7 = vsyncpa [#allocation3], 0
    // Predicated region
    $region2: #{tpu_custom_call.1} parent=1 // pred_check
      _
    $region3: #{tpu_custom_call.1} parent=1 // pred_check_branch
      %9 = sbr.rel (0) target = $region5
    $region4: #{tpu_custom_call.1} parent=1 // pred_region
      _
    $region5: #{tpu_custom_call.1} parent=1 // pred_fallthru
      _
    // Predicated region
    $region6: #{tpu_custom_call.1} parent=1 // pred_check
      _
    $region7: #{tpu_custom_call.1} parent=1 // pred_check_branch
      %11 = sbr.rel (0) target = $region9
    $region8: #{tpu_custom_call.1} parent=1 // pred_region
      _
    $region9: #{tpu_custom_call.1} parent=1 // pred_fallthru
      _
    %v12 = vld [vmem:[%s0] sm:$0xff]
    %v13 = vld [vmem:[%s1] sm:$0xff]
    %v14 = vlaneseq
    %v15 = vshrl.u32 %v14, 7
    %s16 = smul.u32 0, 8
    %v17 = vstv %s16
    %v18 = vadd.s32 %v17, %v15
    %vm19 = vcmp.lt.s32.totalorder %v18, 8
    %vm20 = vcmp.ne.s32.totalorder %v13, 4294967196
    %vm21 = vmand %vm19, %vm20
    %vm22 = vcmask 261120
    %v23 = vsel %vm22, %v12, -inf
    %24 = vmax.xlane.f32.xlu0 %v23
    %v25 = vpop.xlane.xlu0 %24
    %v26 = vsub.f32 %v12, %v25
    %v27 = vmul.f32 %v26, 1.442695
    %v28 = vpow.pop %v27
    %v29 = vsel %vm22, %v28, 0.0
    %30 = vadd.xlane.f32.xlu0 %v29
    %v31 = vpop.xlane.xlu0 %30
    %v32 = vlog2.pop %v31
    %v33 = vmul.f32 %v32, 0.6931472
    %v34 = vadd.f32 %v25, %v33
    %v35 = vlaneseq
    %v36 = vand.u32 %v35, 127
    %37 = vset.pattern.permute.xlu0 0
    %38 = vperm.xlu0 %37, %v13
    %v39 = vpop.permute.xlu0 %38
    %vm40 = vcmp.eq.s32.totalorder %v36, %v39
    %v41 = vsel %vm40, %v12, 0.0
    %v42 = vsel %vm22, %v41, 0.0
    %43 = vadd.xlane.f32.xlu0 %v42
    %v44 = vpop.xlane.xlu0 %43
    %v45 = vsub.f32 %v34, %v44
    %v46 = vsel %vm21, %v45, 0.0
    %vm47 = vcmask 7168
    %v48 = vsel %vm47, %v46, 0.0
    %49 = vadd.xlane.f32.xlu0 %v48
    %v50 = vpop.xlane.xlu0 %49
    %v51 = vrot.slane %v50, 4
    %v52 = vadd.f32 %v50, %v51
    %v53 = vrot.slane %v52, 2
    %v54 = vadd.f32 %v52, %v53
    %v55 = vrot.slane %v54, 1
    %v56 = vadd.f32 %v54, %v55
    %s57 = vtos %v56
    %v58 = vsel %vm21, 1.0, 0.0
    %v59 = vsel %vm47, %v58, 0.0
    %60 = vadd.xlane.f32.xlu0 %v59
    %v61 = vpop.xlane.xlu0 %60
    %v62 = vrot.slane %v61, 4
    %v63 = vadd.f32 %v61, %v62
    %v64 = vrot.slane %v63, 2
    %v65 = vadd.f32 %v63, %v64
    %v66 = vrot.slane %v65, 1
    %v67 = vadd.f32 %v65, %v66
    %s68 = vtos %v67
    %vm69 = vcmp.eq.s32.totalorder %v36, 0
    %vm70 = vcmp.eq.s32.totalorder %v36, 1
    %v71 = vstv %s68
    %v72 = vsel %vm70, %v71, 0.0
    %v73 = vstv %s57
    %v74 = vsel %vm69, %v73, %v72
    %75 = vst [vmem:[#allocation2] sm:$0xff] %v74
    // Predicated region
    $region10: #{tpu_custom_call.1} parent=1 // pred_check
      _
    $region11: #{tpu_custom_call.1} parent=1 // pred_check_branch
      %77 = sbr.rel (0) target = $region13
    $region12: #{tpu_custom_call.1} parent=1 // pred_region
      %79 = vsyncadd [#allocation3], 0
      %s81 = sshll.u32 [#allocation2], 4
      %s82 = int_to_ptr.vmem [resolvable:$true] %s81
      %s83 = sshll.u32 %s2, 4
      %s84 = int_to_ptr.hbm [resolvable:$true] %s83
      %86 = dma.vmem_to_hbm [thread:$0]  %s82, 128, %s84, [#allocation3]
    $region13: #{tpu_custom_call.1} parent=1 // pred_fallthru
      _
    // Predicated region
    $region14: #{tpu_custom_call.1} parent=1 // pred_check
      _
    $region15: #{tpu_custom_call.1} parent=1 // pred_check_branch
      %88 = sbr.rel (0) target = $region17
    $region16: #{tpu_custom_call.1} parent=1 // pred_region
      %90 = dma.done [#allocation3], 128
    $region17: #{tpu_custom_call.1} parent=1 // pred_fallthru
      _
    %91 = vsyncpa [#allocation3], 1

</llo_original>
